<compile_context>
chip_gen: v5e
topology: v5e:2x2
jax: 0.10.0
libtpu: 0.0.40
codegen_flags: <defaults>
</compile_context>

<pallas_src>
import functools

import jax
import jax.numpy as jnp
from jax.experimental import pallas as pl
from jax.experimental.pallas import tpu as pltpu


# ---------------------------------------------------------------------------
# Kernels
# ---------------------------------------------------------------------------
def _se_kernel_3d(x_ref, w1_ref, b1_ref, w2_ref, b2_ref, o_ref):
    """Block layout (TB, C, HW) -- lane-dense whenever HW % 128 == 0."""
    x = x_ref[...]                                          # (TB, C, HW) native
    # Global average pool; f32 accumulation without materializing an f32 copy
    # of the whole tile.
    pooled = jnp.mean(x, axis=2, dtype=jnp.float32)         # (TB, C)
    # fc1 -> Swish (small MXU matmul, f32 accumulation)
    y1 = jnp.dot(pooled, w1_ref[...], preferred_element_type=jnp.float32) + b1_ref[...]
    y1 = y1 * jax.nn.sigmoid(y1)
    # fc2 -> sigmoid
    y2 = jnp.dot(y1, w2_ref[...], preferred_element_type=jnp.float32) + b2_ref[...]
    scale = jax.nn.sigmoid(y2)                              # (TB, C) f32
    # Broadcast per-(sample, channel) scale over HW in the native dtype.
    o_ref[...] = x * scale.astype(x.dtype)[:, :, None]


def _se_kernel_2d(x_ref, w1_ref, b1_ref, w2_ref, b2_ref, o_ref, *, C, HW):
    """Block layout (TB, C*HW): lane-dense HBM<->VMEM tiles even when
    HW % 128 != 0. The (C, HW) view exists only as an on-chip temporary."""
    x2 = x_ref[...]                                         # (TB, C*HW) native
    tb = x2.shape[0]
    x3 = x2.reshape(tb, C, HW)                              # VMEM-internal relayout
    pooled = jnp.mean(x3, axis=2, dtype=jnp.float32)        # (TB, C)
    y1 = jnp.dot(pooled, w1_ref[...], preferred_element_type=jnp.float32) + b1_ref[...]
    y1 = y1 * jax.nn.sigmoid(y1)
    y2 = jnp.dot(y1, w2_ref[...], preferred_element_type=jnp.float32) + b2_ref[...]
    scale = jax.nn.sigmoid(y2)                              # (TB, C) f32
    prod3 = x3 * scale.astype(x2.dtype)[:, :, None]         # (TB, C, HW)
    o_ref[...] = prod3.reshape(tb, C * HW)                  # lane-dense store


# ---------------------------------------------------------------------------
# Tiling helpers
# ---------------------------------------------------------------------------
def _round_up(x, m):
    return ((x + m - 1) // m) * m


def _cdiv(a, b):
    return -(-a // b)


def _sublane(itemsize):
    # f32 -> 8 rows per vreg tile, bf16 -> 16, int8/fp8 -> 32.
    return max(8, 32 // itemsize)


def _device_budgets():
    """(tiling budget, base vmem limit, vmem capacity) per TPU generation."""
    kind = ""
    try:
        kind = jax.devices()[0].device_kind.lower()
    except Exception:
        pass
    try:
        cap = int(pltpu.get_tpu_info().vmem_capacity_bytes)
    except Exception:
        cap = 128 << 20
    if cap <= (64 << 20):
        # v7x-class: 64 MiB VMEM/TC, 3.2 TB/s HBM -> cap the working set and
        # rely on >=4 grid steps (>=2 per TensorCore) for pipelining.
        return 36 << 20, 48 << 20, cap
    if ("v5 lite" in kind) or ("v5e" in kind) or ("v5lite" in kind):
        # v5e: ~0.82 TB/s HBM -> 2-4 MiB tiles already amortize step overhead.
        return 16 << 20, 32 << 20, cap
    # v6e / other 128 MiB parts: bigger tiles so 0.35 us/step stays <5%.
    return 40 << 20, 80 << 20, cap


def _choose_tb(B, tile_bytes_per_sample, cost_bytes_per_sample, budget):
    """Largest TB whose (padding-aware) working set fits `budget`, then shrunk
    toward >=4 grid steps (DMA/compute overlap; >=2 steps per TC on v7x) as
    long as each x tile stays >= ~1 MiB. Non-divisible B is handled with a
    ragged last block (grid = ceil(B/TB)), so TB never collapses for prime B."""
    tb = max(1, min(B, budget // max(1, cost_bytes_per_sample)))
    tb_for_steps = max(1, _cdiv(B, 4))
    tb_floor = max(1, min(tb, _cdiv(1 << 20, max(1, tile_bytes_per_sample))))
    if tb > tb_for_steps:
        tb = max(tb_for_steps, tb_floor)
    if tb >= B and B > 1:
        tb = _cdiv(B, 2)            # always give the pipeline >= 2 steps
    return tb


# ---------------------------------------------------------------------------
# Wrapper
# ---------------------------------------------------------------------------
def prepare_se_params(w1, b1, w2, b2):
    """One-time prep of the tiny FC parameters (hoisted out of the hot loop):
    f32, pre-transposed so the kernel runs (TB,C)@(C,SE) and (TB,SE)@(SE,C)
    with no in-kernel relayout, biases lane-major."""
    SE, C = w1.shape
    w1_t = jnp.asarray(w1, jnp.float32).T.reshape(C, SE)
    w2_t = jnp.asarray(w2, jnp.float32).T.reshape(SE, C)
    b1_r = jnp.asarray(b1, jnp.float32).reshape(1, SE)
    b2_r = jnp.asarray(b2, jnp.float32).reshape(1, C)
    return w1_t, b1_r, w2_t, b2_r


def se_block(x_nchw, params):
    """SEBlock forward. x_nchw: (B, C, H, W) float32 / bfloat16.
    `params` comes from prepare_se_params()."""
    w1_t, b1_r, w2_t, b2_r = params
    B, C, H, W = x_nchw.shape
    SE = w1_t.shape[1]
    HW = H * W
    dtype = x_nchw.dtype
    itemsize = jnp.dtype(dtype).itemsize
    sub = _sublane(itemsize)

    # Layout-padded VMEM sizes (what the hardware actually allocates).
    padded3d = _round_up(C, sub) * _round_up(HW, 128) * itemsize   # per sample
    dense2d = _round_up(C * HW, 128) * itemsize                    # per sample

    budget, base_limit, vmem_cap = _device_budgets()

    use_2d = (HW % 128 != 0) and ((C * HW) % 128 == 0)
    if use_2d:
        # Double-buffered dense in+out tiles plus the two on-chip (C,HW) temps.
        cost_per_sample = 4 * dense2d + 2 * padded3d
        tile_per_sample = dense2d
    else:
        cost_per_sample = 4 * padded3d
        tile_per_sample = padded3d

    TB = _choose_tb(B, tile_per_sample, cost_per_sample, budget)
    grid = (pl.cdiv(B, TB),)

    # TODO(synk): if a single sample's working set ever exceeds VMEM, add a
    # spatial (HW) tiling path with a two-pass pool; EfficientNet SE shapes
    # stay at a few MiB per sample, so TB=1 always fits today.
    needed = cost_per_sample * TB + (4 << 20)
    vmem_limit = int(min(max(base_limit, needed), int(0.9 * vmem_cap)))

    weight_bytes = 4 * (2 * C * SE + C + SE)
    cost = pl.CostEstimate(
        flops=2 * B * C * HW + 4 * B * C * SE,
        transcendentals=B * (C + SE),
        bytes_accessed=2 * B * C * HW * itemsize + weight_bytes,
    )
    cparams = pltpu.CompilerParams(
        dimension_semantics=("parallel",),
        vmem_limit_bytes=vmem_limit,
    )
    param_specs = [
        pl.BlockSpec((C, SE), lambda b: (0, 0)),
        pl.BlockSpec((1, SE), lambda b: (0, 0)),
        pl.BlockSpec((SE, C), lambda b: (0, 0)),
        pl.BlockSpec((1, C), lambda b: (0, 0)),
    ]

    if use_2d:
        x = x_nchw.reshape(B, C * HW)        # free: HBM data is contiguous
        out = pl.pallas_call(
            functools.partial(_se_kernel_2d, C=C, HW=HW),
            out_shape=jax.ShapeDtypeStruct((B, C * HW), dtype),
            grid_spec=pltpu.PrefetchScalarGridSpec(
                num_scalar_prefetch=0,
                grid=grid,
                in_specs=[pl.BlockSpec((TB, C * HW), lambda b: (b, 0))] + param_specs,
                out_specs=pl.BlockSpec((TB, C * HW), lambda b: (b, 0)),
            ),
            compiler_params=cparams,
            cost_estimate=cost,
        )(x, w1_t, b1_r, w2_t, b2_r)
    else:
        x = x_nchw.reshape(B, C, HW)
        out = pl.pallas_call(
            _se_kernel_3d,
            out_shape=jax.ShapeDtypeStruct((B, C, HW), dtype),
            grid_spec=pltpu.PrefetchScalarGridSpec(
                num_scalar_prefetch=0,
                grid=grid,
                in_specs=[pl.BlockSpec((TB, C, HW), lambda b: (b, 0, 0))] + param_specs,
                out_specs=pl.BlockSpec((TB, C, HW), lambda b: (b, 0, 0)),
            ),
            compiler_params=cparams,
            cost_estimate=cost,
        )(x, w1_t, b1_r, w2_t, b2_r)

    return out.reshape(B, C, H, W)


def se_block_ref(x, w1, b1, w2, b2):
    """Pure-JAX reference matching the PyTorch forward."""
    xf = x.astype(jnp.float32)
    pooled = jnp.mean(xf, axis=(2, 3))                      # (B, C)
    y1 = pooled @ w1.astype(jnp.float32).T + b1.astype(jnp.float32)
    y1 = y1 * jax.nn.sigmoid(y1)
    y2 = y1 @ w2.astype(jnp.float32).T + b2.astype(jnp.float32)
    scale = jax.nn.sigmoid(y2)
    return (xf * scale[:, :, None, None]).astype(x.dtype)


if __name__ == "__main__":
    # Small shapes consistent with the module: in_channels=4, se_ratio=0.25.
    B, C, H, W = 2, 4, 16, 16
    SE = max(1, int(C * 0.25))  # = 1

    key = jax.random.PRNGKey(0)
    kx, k1, kb1, k2, kb2 = jax.random.split(key, 5)
    x = jax.random.normal(kx, (B, C, H, W), dtype=jnp.float32)
    # Conv2d 1x1 weights squeezed to 2D.
    w1 = jax.random.normal(k1, (SE, C), dtype=jnp.float32) * 0.5
    b1 = jax.random.normal(kb1, (SE,), dtype=jnp.float32) * 0.1
    w2 = jax.random.normal(k2, (C, SE), dtype=jnp.float32) * 0.5
    b2 = jax.random.normal(kb2, (C,), dtype=jnp.float32) * 0.1

    params = prepare_se_params(w1, b1, w2, b2)   # hoisted one-time prep
    out = jax.block_until_ready(se_block(x, params))
    ref = jax.block_until_ready(se_block_ref(x, w1, b1, w2, b2))

    assert out.shape == (B, C, H, W)
    assert jnp.allclose(out, ref, atol=1e-5, rtol=1e-5), "mismatch vs reference"
    print("KERNEL_OK")
</pallas_src>

<mosaic_0001>
module attributes {stable_mosaic.version = 11 : i64} {
  func.func @_se_kernel_3d(%arg0: i32, %arg1: memref<1x4x256xf32, #tpu.memory_space<vmem>>, %arg2: memref<4x1xf32, #tpu.memory_space<vmem>>, %arg3: memref<1x1xf32, #tpu.memory_space<vmem>>, %arg4: memref<1x4xf32, #tpu.memory_space<vmem>>, %arg5: memref<1x4xf32, #tpu.memory_space<vmem>>, %arg6: memref<1x4x256xf32, #tpu.memory_space<vmem>>) attributes {dimension_semantics = [#tpu.dimension_semantics<parallel>], iteration_bounds = array<i64: 2>, scalar_prefetch = 0 : i64, scratch_operands = 0 : i64, tpu.core_type = #tpu.core_type<tc>, window_params = [{transform_indices = @transform_0, window_bounds = array<i64: 1, 4, 256>}, {pipeline_mode = #tpu.pipeline_mode<synchronous>, transform_indices = @transform_1, window_bounds = array<i64: 4, 1>}, {pipeline_mode = #tpu.pipeline_mode<synchronous>, transform_indices = @transform_2, window_bounds = array<i64: 1, 1>}, {pipeline_mode = #tpu.pipeline_mode<synchronous>, transform_indices = @transform_3, window_bounds = array<i64: 1, 4>}, {pipeline_mode = #tpu.pipeline_mode<synchronous>, transform_indices = @transform_4, window_bounds = array<i64: 1, 4>}, {transform_indices = @transform_5, window_bounds = array<i64: 1, 4, 256>}]} {
    %c0 = arith.constant 0 : index
    %c0_0 = arith.constant 0 : index
    %c0_1 = arith.constant 0 : index
    %0 = vector.load %arg1[%c0, %c0_0, %c0_1] : memref<1x4x256xf32, #tpu.memory_space<vmem>>, vector<1x4x256xf32>
    %cst = arith.constant dense<0.000000e+00> : vector<1x4xf32>
    %1 = vector.multi_reduction <add>, %0, %cst [2] : vector<1x4x256xf32> to vector<1x4xf32>
    %cst_2 = arith.constant 2.560000e+02 : f32
    %2 = vector.broadcast %cst_2 : f32 to vector<1x4xf32>
    %3 = arith.divf %1, %2 : vector<1x4xf32>
    %c0_3 = arith.constant 0 : index
    %c0_4 = arith.constant 0 : index
    %4 = vector.load %arg2[%c0_3, %c0_4] : memref<4x1xf32, #tpu.memory_space<vmem>>, vector<4x1xf32>
    %cst_5 = arith.constant dense<0.000000e+00> : vector<1x1xf32>
    %5 = tpu.matmul %3, %4, %cst_5 {dimension_numbers = #tpu.dot_dimension_numbers<[1], [0], [0], [1], [0, 0, 1, 1], [], []>} : vector<1x4xf32>, vector<4x1xf32>, vector<1x1xf32> -> vector<1x1xf32>
    %c0_6 = arith.constant 0 : index
    %c0_7 = arith.constant 0 : index
    %6 = vector.load %arg3[%c0_6, %c0_7] : memref<1x1xf32, #tpu.memory_space<vmem>>, vector<1x1xf32>
    %7 = arith.addf %5, %6 : vector<1x1xf32>
    %8 = arith.negf %7 : vector<1x1xf32>
    %9 = math.exp %8 : vector<1x1xf32>
    %cst_8 = arith.constant 1.000000e+00 : f32
    %10 = vector.broadcast %cst_8 : f32 to vector<1x1xf32>
    %11 = arith.addf %10, %9 : vector<1x1xf32>
    %12 = arith.divf %10, %11 : vector<1x1xf32>
    %13 = arith.mulf %7, %12 : vector<1x1xf32>
    %c0_9 = arith.constant 0 : index
    %c0_10 = arith.constant 0 : index
    %14 = vector.load %arg4[%c0_9, %c0_10] : memref<1x4xf32, #tpu.memory_space<vmem>>, vector<1x4xf32>
    %cst_11 = arith.constant dense<0.000000e+00> : vector<1x4xf32>
    %15 = tpu.matmul %13, %14, %cst_11 {dimension_numbers = #tpu.dot_dimension_numbers<[1], [0], [0], [1], [0, 0, 1, 1], [], []>} : vector<1x1xf32>, vector<1x4xf32>, vector<1x4xf32> -> vector<1x4xf32>
    %c0_12 = arith.constant 0 : index
    %c0_13 = arith.constant 0 : index
    %16 = vector.load %arg5[%c0_12, %c0_13] : memref<1x4xf32, #tpu.memory_space<vmem>>, vector<1x4xf32>
    %17 = arith.addf %15, %16 : vector<1x4xf32>
    %18 = arith.negf %17 : vector<1x4xf32>
    %19 = math.exp %18 : vector<1x4xf32>
    %cst_14 = arith.constant 1.000000e+00 : f32
    %20 = vector.broadcast %cst_14 : f32 to vector<1x4xf32>
    %21 = arith.addf %20, %19 : vector<1x4xf32>
    %22 = arith.divf %20, %21 : vector<1x4xf32>
    %23 = vector.shape_cast %22 : vector<1x4xf32> to vector<1x4x1xf32>
    %24 = vector.broadcast %23 : vector<1x4x1xf32> to vector<1x4x256xf32>
    %25 = arith.mulf %0, %24 : vector<1x4x256xf32>
    %c0_15 = arith.constant 0 : index
    %c0_16 = arith.constant 0 : index
    %c0_17 = arith.constant 0 : index
    %26 = vector.load %arg6[%c0_15, %c0_16, %c0_17] : memref<1x4x256xf32, #tpu.memory_space<vmem>>, vector<1x4x256xf32>
    tpu.vector_store %arg6[%c0_15, %c0_16, %c0_17], %25 {strides = array<i32>} : memref<1x4x256xf32, #tpu.memory_space<vmem>>, vector<1x4x256xf32>,
    return
  }
  func.func @transform_0(%arg0: i32) -> (i32, i32, i32) {
    %c0_i32 = arith.constant 0 : i32
    %c0_i32_0 = arith.constant 0 : i32
    %c0_i32_1 = arith.constant 0 : i32
    return %arg0, %c0_i32, %c0_i32_0 : i32, i32, i32
  }
  func.func @transform_1(%arg0: i32) -> (i32, i32) {
    %c0_i32 = arith.constant 0 : i32
    %c0_i32_0 = arith.constant 0 : i32
    %c0_i32_1 = arith.constant 0 : i32
    return %c0_i32, %c0_i32_0 : i32, i32
  }
  func.func @transform_2(%arg0: i32) -> (i32, i32) {
    %c0_i32 = arith.constant 0 : i32
    %c0_i32_0 = arith.constant 0 : i32
    %c0_i32_1 = arith.constant 0 : i32
    return %c0_i32, %c0_i32_0 : i32, i32
  }
  func.func @transform_3(%arg0: i32) -> (i32, i32) {
    %c0_i32 = arith.constant 0 : i32
    %c0_i32_0 = arith.constant 0 : i32
    %c0_i32_1 = arith.constant 0 : i32
    return %c0_i32, %c0_i32_0 : i32, i32
  }
  func.func @transform_4(%arg0: i32) -> (i32, i32) {
    %c0_i32 = arith.constant 0 : i32
    %c0_i32_0 = arith.constant 0 : i32
    %c0_i32_1 = arith.constant 0 : i32
    return %c0_i32, %c0_i32_0 : i32, i32
  }
  func.func @transform_5(%arg0: i32) -> (i32, i32, i32) {
    %c0_i32 = arith.constant 0 : i32
    %c0_i32_0 = arith.constant 0 : i32
    %c0_i32_1 = arith.constant 0 : i32
    return %arg0, %c0_i32, %c0_i32_0 : i32, i32, i32
  }
}

</mosaic_0001>

<llo_original>
// kernel: tpu_custom_call.1
$region0: #{tpu_custom_call.1}
  #allocation0 [shape = 'u32[]', space=smem, size = 0x4, offset = 0x4, fixed_abs, tag = 'smem constant byte address 0x4 - core index']
  #allocation1 [shape = 'u32[72,128]{1,0:T(1,128)}', space=vmem, size = 0x9000, scoped, tag = 'internal scratch']
  #allocation2 [shape = 'f32[1,1]{1,0:T(1,128)S(1)}', space=vmem, size = 0x200, scoped, tag = 'scoped memory for tpu_custom_call.1']
  %s0 = inlined_call_operand.hbm [shape: f32[2,4,256], index: 0, kind: input, shape index: {}]
  %s1 = inlined_call_operand.vmem [shape: f32[4,1], index: 1, kind: input, shape index: {}]
  %s2 = inlined_call_operand.<no memory space> [shape: f32[1,1], index: 2, kind: input, shape index: {}]
  %s3 = inlined_call_operand.vmem [shape: f32[1,4], index: 3, kind: input, shape index: {}]
  %s4 = inlined_call_operand.vmem [shape: f32[1,4], index: 4, kind: input, shape index: {}]
  %s5 = inlined_call_operand.hbm [shape: f32[2,4,256], index: 5, kind: output, shape index: {}]
  %s6 = sld [smem:[#allocation0]]
  $region57: #{tpu_custom_call.1} parent=0
    _
  %s8 = ssub.s32 1, %s6
  %s9 = scalar_select 0, %s8, %s6
  %v10 = vstv %s2
  %11 = vst [vmem:[#allocation2] sm:$0x1] %v10
  $region1: #{tpu_custom_call.1} parent=0
    #allocation3 [shape = 'u8[8192]{0}', space=vmem, size = 0x2000, scoped, tag = 'input window, operand 0']
    #allocation4 [shape = 's32[2]{0}', space=sflag, size = 0x8, scoped, tag = 'scoped memory for tpu_custom_call.1']
    #allocation5 [shape = 's32[2]{0}', space=sflag, size = 0x8, scoped, tag = 'scoped memory for tpu_custom_call.1']
    #allocation6 [shape = 'u8[8192]{0}', space=vmem, size = 0x2000, scoped, tag = 'output window, operand 0']
    %12 = vsyncpa [#allocation4], 0
    %s13 = scalar_lea.sflag [#allocation4], 1
    %14 = vsyncpa %s13, 0
    %15 = vsyncpa [#allocation5], 0
    %s16 = scalar_lea.sflag [#allocation5], 1
    %17 = vsyncpa %s16, 0
    loop: start=0, step=1, limit=4
    $region2: #{tpu_custom_call.1} parent=1 // loop_pre_header
      _
    $region3: #{tpu_custom_call.1} parent=1 // loop_header
      %s19 = sphi 0, %s23
      %p20 = scmp.ge.s32.totalorder %s19, 4
      %s29 = sphi 0, %s31
      %s32 = sphi 0, %s29
      %s33 = sphi 0, %s32
      %s49 = sphi 0, %s33
      %s53 = sphi 0, %s53
      %s55 = sphi 0, %s53
      %s56 = sphi 0, %s55
      %s70 = sphi 0, %s56
      %s74 = sphi 0, %s74
      %s76 = sphi 0, %s74
      %s77 = sphi 0, %s76
      %s91 = sphi 0, %s77
      %s95 = sphi 0, %s95
      %s97 = sphi 0, %s95
      %s98 = sphi 0, %s97
      %s112 = sphi 0, %s98
      %s116 = sphi 0, %s116
      %s118 = sphi 0, %s116
      %s119 = sphi 0, %s118
      %s133 = sphi 0, %s119
      %s139 = sphi 0, %s141
      %s142 = sphi 0, %s139
      %s143 = sphi 0, %s142
      %s159 = sphi 0, %s143
    $region4: #{tpu_custom_call.1} parent=1 // loop_header_branch
      %22 = sbr.rel (%p20) target = $region8
    $region5: #{tpu_custom_call.1} parent=1 // loop_body
      %s24 = ssub.s32 %s19, 1
      %s25 = ssub.s32 %s19, 2
      %s26 = sadd.s32 %s19, 1
      %s27 = ssub.s32 %s19, %s26
      %p28 = scmp.eq.s32.totalorder %s27, 0
      %s30 = sadd.s32 %s29, 1
      %s31 = scalar_select %p28, %s29, %s30
      %p34 = pneg %p28
      %p35 = scmp.eq.s32.totalorder %s19, 1
      %p36 = por %p34, %p35
      %p37 = scmp.ne.s32.totalorder %s29, %s32
      %p38 = scmp.eq.s32.totalorder %s19, 0
      %p39 = por %p37, %p38
      %p40 = scmp.ne.s32.totalorder %s29, %s32
      %p41 = scmp.eq.s32.totalorder %s24, 1
      %p42 = por %p40, %p41
      %p43 = scmp.ne.s32.totalorder %s32, %s33
      %p44 = scmp.eq.s32.totalorder %s24, 0
      %p45 = por %p43, %p44
      %p46 = scmp.ne.s32.totalorder %s32, %s33
      %p47 = scmp.eq.s32.totalorder %s25, 1
      %p48 = por %p46, %p47
      %p50 = scmp.ne.s32.totalorder %s33, %s49
      %p51 = scmp.eq.s32.totalorder %s25, 0
      %p52 = por %p50, %p51
      %s54 = sadd.s32 %s53, 1
      %p57 = scmp.eq.s32.totalorder %s19, 1
      %p58 = scmp.ne.s32.totalorder %s53, %s55
      %p59 = scmp.eq.s32.totalorder %s19, 0
      %p60 = por %p58, %p59
      %p61 = scmp.ne.s32.totalorder %s53, %s55
      %p62 = scmp.eq.s32.totalorder %s24, 1
      %p63 = por %p61, %p62
      %p64 = scmp.ne.s32.totalorder %s55, %s56
      %p65 = scmp.eq.s32.totalorder %s24, 0
      %p66 = por %p64, %p65
      %p67 = scmp.ne.s32.totalorder %s55, %s56
      %p68 = scmp.eq.s32.totalorder %s25, 1
      %p69 = por %p67, %p68
      %p71 = scmp.ne.s32.totalorder %s56, %s70
      %p72 = scmp.eq.s32.totalorder %s25, 0
      %p73 = por %p71, %p72
      %s75 = sadd.s32 %s74, 1
      %p78 = scmp.eq.s32.totalorder %s19, 1
      %p79 = scmp.ne.s32.totalorder %s74, %s76
      %p80 = scmp.eq.s32.totalorder %s19, 0
      %p81 = por %p79, %p80
      %p82 = scmp.ne.s32.totalorder %s74, %s76
      %p83 = scmp.eq.s32.totalorder %s24, 1
      %p84 = por %p82, %p83
      %p85 = scmp.ne.s32.totalorder %s76, %s77
      %p86 = scmp.eq.s32.totalorder %s24, 0
      %p87 = por %p85, %p86
      %p88 = scmp.ne.s32.totalorder %s76, %s77
      %p89 = scmp.eq.s32.totalorder %s25, 1
      %p90 = por %p88, %p89
      %p92 = scmp.ne.s32.totalorder %s77, %s91
      %p93 = scmp.eq.s32.totalorder %s25, 0
      %p94 = por %p92, %p93
      %s96 = sadd.s32 %s95, 1
      %p99 = scmp.eq.s32.totalorder %s19, 1
      %p100 = scmp.ne.s32.totalorder %s95, %s97
      %p101 = scmp.eq.s32.totalorder %s19, 0
      %p102 = por %p100, %p101
      %p103 = scmp.ne.s32.totalorder %s95, %s97
      %p104 = scmp.eq.s32.totalorder %s24, 1
      %p105 = por %p103, %p104
      %p106 = scmp.ne.s32.totalorder %s97, %s98
      %p107 = scmp.eq.s32.totalorder %s24, 0
      %p108 = por %p106, %p107
      %p109 = scmp.ne.s32.totalorder %s97, %s98
      %p110 = scmp.eq.s32.totalorder %s25, 1
      %p111 = por %p109, %p110
      %p113 = scmp.ne.s32.totalorder %s98, %s112
      %p114 = scmp.eq.s32.totalorder %s25, 0
      %p115 = por %p113, %p114
      %s117 = sadd.s32 %s116, 1
      %p120 = scmp.eq.s32.totalorder %s19, 1
      %p121 = scmp.ne.s32.totalorder %s116, %s118
      %p122 = scmp.eq.s32.totalorder %s19, 0
      %p123 = por %p121, %p122
      %p124 = scmp.ne.s32.totalorder %s116, %s118
      %p125 = scmp.eq.s32.totalorder %s24, 1
      %p126 = por %p124, %p125
      %p127 = scmp.ne.s32.totalorder %s118, %s119
      %p128 = scmp.eq.s32.totalorder %s24, 0
      %p129 = por %p127, %p128
      %p130 = scmp.ne.s32.totalorder %s118, %s119
      %p131 = scmp.eq.s32.totalorder %s25, 1
      %p132 = por %p130, %p131
      %p134 = scmp.ne.s32.totalorder %s119, %s133
      %p135 = scmp.eq.s32.totalorder %s25, 0
      %p136 = por %p134, %p135
      %s137 = ssub.s32 %s19, %s26
      %p138 = scmp.eq.s32.totalorder %s137, 0
      %s140 = sadd.s32 %s139, 1
      %s141 = scalar_select %p138, %s139, %s140
      %p144 = pneg %p138
      %p145 = scmp.eq.s32.totalorder %s19, 1
      %p146 = por %p144, %p145
      %p147 = scmp.ne.s32.totalorder %s139, %s142
      %p148 = scmp.eq.s32.totalorder %s19, 0
      %p149 = por %p147, %p148
      %p150 = scmp.ne.s32.totalorder %s139, %s142
      %p151 = scmp.eq.s32.totalorder %s24, 1
      %p152 = por %p150, %p151
      %p153 = scmp.ne.s32.totalorder %s142, %s143
      %p154 = scmp.eq.s32.totalorder %s24, 0
      %p155 = por %p153, %p154
      %p156 = scmp.ne.s32.totalorder %s142, %s143
      %p157 = scmp.eq.s32.totalorder %s25, 1
      %p158 = por %p156, %p157
      %p160 = scmp.ne.s32.totalorder %s143, %s159
      %p161 = scmp.eq.s32.totalorder %s25, 0
      %p162 = por %p160, %p161
      %p163 = scmp.le.s32.totalorder 1, %s19
      %p164 = scmp.lt.s32.totalorder %s19, 3
      %p165 = pnand %p163, %p164
      %p166 = pneg %p165
      // Predicated region
      $region9: #{tpu_custom_call.1} parent=5 // pred_check
        _
      $region10: #{tpu_custom_call.1} parent=5 // pred_check_branch
        %168 = sbr.rel (%p165) target = $region12
      $region11: #{tpu_custom_call.1} parent=5 // pred_region
        %s169 = ssub.s32 %s19, 1
        // Predicated region
        $region13: #{tpu_custom_call.1} parent=11 // pred_check
          %p170 = pneg %p66
        $region14: #{tpu_custom_call.1} parent=11 // pred_check_branch
          %172 = sbr.rel (%p170) target = $region16
        $region15: #{tpu_custom_call.1} parent=11 // pred_region
          _
        $region16: #{tpu_custom_call.1} parent=11 // pred_fallthru
          _
        // Predicated region
        $region17: #{tpu_custom_call.1} parent=11 // pred_check
          %p173 = pneg %p87
        $region18: #{tpu_custom_call.1} parent=11 // pred_check_branch
          %175 = sbr.rel (%p173) target = $region20
        $region19: #{tpu_custom_call.1} parent=11 // pred_region
          _
        $region20: #{tpu_custom_call.1} parent=11 // pred_fallthru
          _
        // Predicated region
        $region21: #{tpu_custom_call.1} parent=11 // pred_check
          %p176 = pneg %p108
        $region22: #{tpu_custom_call.1} parent=11 // pred_check_branch
          %178 = sbr.rel (%p176) target = $region24
        $region23: #{tpu_custom_call.1} parent=11 // pred_region
          _
        $region24: #{tpu_custom_call.1} parent=11 // pred_fallthru
          _
        // Predicated region
        $region25: #{tpu_custom_call.1} parent=11 // pred_check
          %p179 = pneg %p129
        $region26: #{tpu_custom_call.1} parent=11 // pred_check_branch
          %181 = sbr.rel (%p179) target = $region28
        $region27: #{tpu_custom_call.1} parent=11 // pred_region
          _
        $region28: #{tpu_custom_call.1} parent=11 // pred_fallthru
          _
      $region12: #{tpu_custom_call.1} parent=5 // pred_fallthru
        _
      %p182 = scmp.lt.s32.totalorder %s19, 2
      // Predicated region
      $region29: #{tpu_custom_call.1} parent=5 // pred_check
        %p183 = pneg %p182
      $region30: #{tpu_custom_call.1} parent=5 // pred_check_branch
        %185 = sbr.rel (%p183) target = $region32
      $region31: #{tpu_custom_call.1} parent=5 // pred_region
        // Predicated region
        $region33: #{tpu_custom_call.1} parent=31 // pred_check
          %p186 = pneg %p39
        $region34: #{tpu_custom_call.1} parent=31 // pred_check_branch
          %188 = sbr.rel (%p186) target = $region36
        $region35: #{tpu_custom_call.1} parent=31 // pred_region
          %s189 = sand.u32 %s29, 1
          %s190 = scalar_lea.sflag [#allocation4], %s189
          %s191 = sand.u32 %s29, 1
          %s192 = smul.addr %s191, 8
          %s193 = scalar_lea.vmem [#allocation3], %s192
          %195 = vsyncadd %s190, 0
          %s196 = smul.addr %s19, 2
          %s197 = smul.addr %s196, 4
          %s198 = scalar_lea.hbm %s0, %s197
          %s200 = sshll.u32 %s198, 4
          %s201 = int_to_ptr.hbm [resolvable:$true] %s200
          %s202 = sshll.u32 %s193, 4
          %s203 = int_to_ptr.vmem [resolvable:$true] %s202
          %205 = dma.hbm_to_vmem [thread:$0]  %s201, 128, %s203, %s190
        $region36: #{tpu_custom_call.1} parent=31 // pred_fallthru
          _
      $region32: #{tpu_custom_call.1} parent=5 // pred_fallthru
        _
      %p206 = scmp.le.s32.totalorder 1, %s19
      %p207 = scmp.lt.s32.totalorder %s19, 3
      %p208 = pnand %p206, %p207
      %p209 = pneg %p208
      // Predicated region
      $region37: #{tpu_custom_call.1} parent=5 // pred_check
        _
      $region38: #{tpu_custom_call.1} parent=5 // pred_check_branch
        %211 = sbr.rel (%p208) target = $region40
      $region39: #{tpu_custom_call.1} parent=5 // pred_region
        %s212 = ssub.s32 %s19, 1
        %s213 = sand.u32 %s32, 1
        %s214 = scalar_lea.sflag [#allocation4], %s213
        %s215 = sand.u32 %s32, 1
        %s216 = smul.addr %s215, 8
        %s217 = scalar_lea.vmem [#allocation3], %s216
        // Predicated region
        $region41: #{tpu_custom_call.1} parent=39 // pred_check
          %p218 = pneg %p45
        $region42: #{tpu_custom_call.1} parent=39 // pred_check_branch
          %220 = sbr.rel (%p218) target = $region44
        $region43: #{tpu_custom_call.1} parent=39 // pred_region
          %222 = dma.done %s214, 128
        $region44: #{tpu_custom_call.1} parent=39 // pred_fallthru
          _
        %s223 = sand.u32 %s32, 1
        %s224 = scalar_lea.sflag [#allocation4], %s223
        %s225 = sand.u32 %s32, 1
        %s226 = smul.addr %s225, 8
        %s227 = scalar_lea.vmem [#allocation3], %s226
        %p228 = pneg %p45
        %p229 = pneg %p42
        %p230 = pneg %p66
        %p231 = pneg %p63
        %p232 = pneg %p87
        %p233 = pneg %p84
        %p234 = pneg %p108
        %p235 = pneg %p105
        %p236 = pneg %p129
        %p237 = pneg %p126
        %p238 = pneg %p155
        %p239 = pneg %p152
        %s240 = sand.u32 %s142, 1
        %s241 = scalar_lea.sflag [#allocation5], %s240
        %s242 = sand.u32 %s142, 1
        %s243 = smul.addr %s242, 8
        %s244 = scalar_lea.vmem [#allocation6], %s243
        %v245 = vld [vmem:[%s217] sm:$0xff]
        %247 = vst [vmem:[#allocation1] ss:$2 sm:$0xff] %v245
        %v248 = vld.sshfl [vmem:[#allocation1] sm:$0xff pattern:$0x75316420]
        %v249 = vld.sshfl [vmem:[#allocation1 + $0x8] sm:$0xff pattern:$0x75316420]
        %vm252 = vcmask 1043456
        %v253 = vsel %vm252, %v248, 0.0
        %v254 = vsel %vm252, %v249, 0.0
        %v255 = vadd.f32 %v253, %v254
        %256 = vadd.xlane.f32.xlu0 %v255
        %v257 = vpop.xlane.xlu0 %256
        %v258 = vrcp.pop 256.0
        %v259 = vmul.f32 256.0, %v258
        %v260 = vsub.f32 1.0, %v259
        %v261 = vmul.f32 %v258, %v260
        %v262 = vadd.f32 %v258, %v261
        %vm263 = vweird.f32 %v258
        %v264 = vsel %vm263, %v258, %v262
        %v265 = vmul.f32 %v257, %v264
        %v266 = vld [vmem:[%s1] sm:$0xf]
        %v267 = vld [vmem:[#allocation2] sm:$0x1]
        %v269 = vlaneseq
        %v270 = vand.u32 %v269, 127
        %v271 = vperm.slane %v265, %v270
        %vm272 = vcmask 31744
        %v273 = vsel %vm272, %v271, 0
        %v276 = vsel %vm252, %v266, 0
        %278 = vmatpush.msra.mxu0 0.0
        %279 = vmatpush.msra.mxu0 0.0
        %280 = vmatpush.msra.mxu0 0.0
        %281 = vmatpush.msra.mxu0 0.0
        %282 = vmatpush.msra.mxu0 0.0
        %283 = vmatpush.msra.mxu0 0.0
        %284 = vmatpush.msra.mxu0 0.0
        %285 = vmatpush.msra.mxu0 0.0
        %286 = vmatpush.msra.mxu0 0.0
        %287 = vmatpush.msra.mxu0 0.0
        %288 = vmatpush.msra.mxu0 0.0
        %289 = vmatpush.msra.mxu0 0.0
        %290 = vmatpush.msra.mxu0 0.0
        %291 = vmatpush.msra.mxu0 0.0
        %292 = vmatpush.msra.mxu0 0.0
        %293 = vmatpush.msra.mxu0 %v276
        %294 = vmatmul.f32.gmra.mxu0 %v273
        %v295 = vpop.f32.mrf.mxu0
        %v296 = vadd.f32 %v267, %v295
        %297 = vdwg.mxu0
        %v298 = vxor.u32 %v296, 2147483648
        %v299 = vmul.f32 %v298, 1.442695
        %v300 = vpow.pop %v299
        %v301 = vadd.f32 %v300, 1.0
        %v302 = vrcp.pop %v301
        %v303 = vmul.f32 %v301, %v302
        %v304 = vsub.f32 1.0, %v303
        %v305 = vmul.f32 %v302, %v304
        %v306 = vadd.f32 %v302, %v305
        %vm307 = vweird.f32 %v301
        %vm308 = vweird.f32 %v302
        %vm309 = vmor %vm307, %vm308
        %v310 = vsel %vm309, %v302, %v306
        %v311 = vand.u32 2147483647, %v301
        %vm312 = vcmp.eq.f32.partialorder %v311, 8.507059e+37
        %v313 = vand.u32 %v301, 2147483648
        %v314 = vor.u32 1.1754944e-38, %v313
        %v315 = vsel %vm312, %v314, %v310
        %v316 = vmul.f32 1.0, %v315
        %v317 = vmul.f32 %v296, %v316
        %v318 = vld [vmem:[%s3] sm:$0x1]
        %v319 = vld [vmem:[%s4] sm:$0x1]
        %vm320 = vcmask 7168
        %v322 = vsel %vm320, %v317, 0
        %vm324 = vcmask 1040384
        %v326 = vsel %vm324, %v318, 0
        %328 = vmatpush.msra.mxu0 0.0
        %329 = vmatpush.msra.mxu0 0.0
        %330 = vmatpush.msra.mxu0 0.0
        %331 = vmatpush.msra.mxu0 0.0
        %332 = vmatpush.msra.mxu0 0.0
        %333 = vmatpush.msra.mxu0 0.0
        %334 = vmatpush.msra.mxu0 0.0
        %335 = vmatpush.msra.mxu0 0.0
        %336 = vmatpush.msra.mxu0 0.0
        %337 = vmatpush.msra.mxu0 0.0
        %338 = vmatpush.msra.mxu0 0.0
        %339 = vmatpush.msra.mxu0 0.0
        %340 = vmatpush.msra.mxu0 0.0
        %341 = vmatpush.msra.mxu0 0.0
        %342 = vmatpush.msra.mxu0 0.0
        %343 = vmatpush.msra.mxu0 %v326
        %344 = vmatmul.f32.gmra.mxu0 %v322
        %v345 = vpop.f32.mrf.mxu0
        %v346 = vadd.f32 %v319, %v345
        %347 = vdwg.mxu0
        %v348 = vxor.u32 %v346, 2147483648
        %v349 = vmul.f32 %v348, 1.442695
        %v350 = vpow.pop %v349
        %v351 = vadd.f32 %v350, 1.0
        %v352 = vrcp.pop %v351
        %v353 = vmul.f32 %v351, %v352
        %v354 = vsub.f32 1.0, %v353
        %v355 = vmul.f32 %v352, %v354
        %v356 = vadd.f32 %v352, %v355
        %vm357 = vweird.f32 %v351
        %vm358 = vweird.f32 %v352
        %vm359 = vmor %vm357, %vm358
        %v360 = vsel %vm359, %v352, %v356
        %v361 = vand.u32 2147483647, %v351
        %vm362 = vcmp.eq.f32.partialorder %v361, 8.507059e+37
        %v363 = vand.u32 %v351, 2147483648
        %v364 = vor.u32 1.1754944e-38, %v363
        %v365 = vsel %vm362, %v364, %v360
        %v366 = vmul.f32 1.0, %v365
        %v367 = vperm.slane %v366, 0
        %v368 = vlaneseq
        %v369 = vshrl.u32 %v368, 7
        %371 = vset.pattern.permute.xlu0 %v369
        %372 = vperm.xlu0 %371, %v367
        %v373 = vpop.permute.xlu0 %372
        %v376 = vunpack.c.l.s4 839922192
        %v377 = vunpack.c.0.s8 %v376
        %v378 = vperm.slane %v373, %v377
        %v380 = vmul.f32 %v245, %v378
        %381 = vst [vmem:[%s244] sm:$0xff] %v380
        %s382 = sand.u32 %s142, 1
        %s383 = scalar_lea.sflag [#allocation5], %s382
        %s384 = sand.u32 %s142, 1
        %s385 = smul.addr %s384, 8
        %s386 = scalar_lea.vmem [#allocation6], %s385
        // Predicated region
        $region45: #{tpu_custom_call.1} parent=39 // pred_check
          %p387 = pneg %p152
        $region46: #{tpu_custom_call.1} parent=39 // pred_check_branch
          %389 = sbr.rel (%p387) target = $region48
        $region47: #{tpu_custom_call.1} parent=39 // pred_region
          %391 = vsyncadd %s383, 0
          %s392 = smul.addr %s24, 2
          %s393 = smul.addr %s392, 4
          %s394 = scalar_lea.hbm %s5, %s393
          %s396 = sshll.u32 %s386, 4
          %s397 = int_to_ptr.vmem [resolvable:$true] %s396
          %s398 = sshll.u32 %s394, 4
          %s399 = int_to_ptr.hbm [resolvable:$true] %s398
          %401 = dma.vmem_to_hbm [thread:$0]  %s397, 128, %s399, %s383
        $region48: #{tpu_custom_call.1} parent=39 // pred_fallthru
          _
      $region40: #{tpu_custom_call.1} parent=5 // pred_fallthru
        _
      %p402 = scmp.le.s32.totalorder 2, %s19
      // Predicated region
      $region49: #{tpu_custom_call.1} parent=5 // pred_check
        %p403 = pneg %p402
      $region50: #{tpu_custom_call.1} parent=5 // pred_check_branch
        %405 = sbr.rel (%p403) target = $region52
      $region51: #{tpu_custom_call.1} parent=5 // pred_region
        %s406 = ssub.s32 %s19, 2
        // Predicated region
        $region53: #{tpu_custom_call.1} parent=51 // pred_check
          %p407 = pneg %p158
        $region54: #{tpu_custom_call.1} parent=51 // pred_check_branch
          %409 = sbr.rel (%p407) target = $region56
        $region55: #{tpu_custom_call.1} parent=51 // pred_region
          %s410 = sand.u32 %s143, 1
          %s411 = scalar_lea.sflag [#allocation5], %s410
          %s412 = sand.u32 %s143, 1
          %s413 = smul.addr %s412, 8
          %s414 = scalar_lea.vmem [#allocation6], %s413
          %416 = dma.done %s411, 128
        $region56: #{tpu_custom_call.1} parent=51 // pred_fallthru
          _
      $region52: #{tpu_custom_call.1} parent=5 // pred_fallthru
        _
    $region6: #{tpu_custom_call.1} parent=1 // loop_footer
      %s23 = sadd.s32 1, %s19
    $region7: #{tpu_custom_call.1} parent=1 // loop_footer_branch
      %18 = sbr.rel target = $region3
    $region8: #{tpu_custom_call.1} parent=1 // loop_exit
      _
    %417 = vsyncpa [#allocation4], 1
    %s418 = scalar_lea.sflag [#allocation4], 1
    %419 = vsyncpa %s418, 1
    %420 = vsyncpa [#allocation5], 1
    %s421 = scalar_lea.sflag [#allocation5], 1
    %422 = vsyncpa %s421, 1

</llo_original>
